<compile_context>
chip_gen: v6e
topology: v6e:2x2x1
jax: 0.10.0
libtpu: 0.0.40
codegen_flags: <defaults>
</compile_context>

<pallas_src>
from functools import partial

import numpy as np
import jax
import jax.numpy as jnp
from jax import lax
from jax.experimental import pallas as pl
from jax.experimental.pallas import tpu as pltpu

N = 128                # matrix dimension implied by the masks (8*8*2 lattice dof)
DIAG_CLAMP = 0.001     # torch: maximum(L.diag.real, 0.001)


# ----------------------------- Pallas kernel --------------------------------
def _kcondition_kernel(dd_ref, l_ref, out_ref):
    DD = dd_ref[0]        # (N, N) f32
    Lraw = l_ref[0]       # (N, N) f32 (scattered L entries, diag not yet clamped)

    row = lax.broadcasted_iota(jnp.int32, (N, N), 0)
    col = lax.broadcasted_iota(jnp.int32, (N, N), 1)
    diag = row == col

    # L[i, i] = max(L[i, i], 0.001)  (real dtype -> .real is identity)
    L = jnp.where(diag, jnp.maximum(Lraw, DIAG_CLAMP), Lraw)

    # trace(L^H DD L) = sum(conj(L) * (DD @ L)); conj is a no-op for real dtype.
    DDL = jnp.dot(DD, L, preferred_element_type=jnp.float32)          # MXU
    tp = jnp.sum(jnp.sum(L * DDL, axis=1, keepdims=True),
                 axis=0, keepdims=True)                               # (1, 1)

    # trace(DD)
    tdd = jnp.sum(jnp.sum(jnp.where(diag, DD, 0.0), axis=1, keepdims=True),
                  axis=0, keepdims=True)                              # (1, 1)

    # sum(log(diag(L^H L))) ; diag(L^H L)_i = ||L[:, i]||^2
    col_sq = jnp.sum(L * L, axis=0, keepdims=True)                    # (1, N)
    dll = jnp.sum(jnp.log(col_sq), axis=1, keepdims=True)             # (1, 1)

    out_ref[0] = (tp / tdd) / dll                                     # (1, 1)


def _kcondition_ratios(DD_mats, L_mats):
    """Per-batch trace(L^H DD L) / trace(DD) / sum(log(diag(L^H L))), shape (B,)."""
    B = DD_mats.shape[0]
    ratios = pl.pallas_call(
        _kcondition_kernel,
        out_shape=jax.ShapeDtypeStruct((B, 1, 1), jnp.float32),
        grid_spec=pltpu.PrefetchScalarGridSpec(
            num_scalar_prefetch=0,
            grid=(B,),
            in_specs=[
                pl.BlockSpec((1, N, N), lambda b: (b, 0, 0)),   # DD
                pl.BlockSpec((1, N, N), lambda b: (b, 0, 0)),   # L (unclamped)
            ],
            out_specs=pl.BlockSpec((1, 1, 1), lambda b: (b, 0, 0)),
        ),
        compiler_params=pltpu.CompilerParams(
            dimension_semantics=("parallel",)),
    )(DD_mats.astype(jnp.float32), L_mats.astype(jnp.float32))
    return ratios.reshape(B)


# ------------------------------ plain-JAX glue -------------------------------
def reconstruct_mat(entries, rows, cols, n):
    """torch: M = zeros(B, n, n); M[:, mask] = entries  (row-major True order)."""
    B = entries.shape[0]
    return jnp.zeros((B, n, n), entries.dtype).at[:, rows, cols].set(entries)


def kcondition_loss(DD_entries, L_entries, maskDD_idx, maskL_idx):
    """KconditionLoss.forward (real-dtype path)."""
    DD = reconstruct_mat(DD_entries, maskDD_idx[0], maskDD_idx[1], N)
    L = reconstruct_mat(L_entries, maskL_idx[0], maskL_idx[1], N)
    ratios = _kcondition_ratios(DD, L)      # diag clamp + traces fused in-kernel
    return jnp.mean(ratios)


def _reference_loss(DD_entries, L_entries, maskDD_idx, maskL_idx):
    """Literal (un-fused) translation of the torch module, for validation."""
    DD = reconstruct_mat(DD_entries, maskDD_idx[0], maskDD_idx[1], N)
    L = reconstruct_mat(L_entries, maskL_idx[0], maskL_idx[1], N)
    i = jnp.arange(N)
    d = jnp.maximum(L[:, i, i], DIAG_CLAMP)
    L = L.at[:, i, i].set(d)
    Lt = jnp.swapaxes(L, -2, -1)
    hp = lax.Precision.HIGHEST
    pre = jnp.matmul(jnp.matmul(Lt, DD, precision=hp), L, precision=hp)
    LL = jnp.matmul(Lt, L, precision=hp)
    tp = jnp.trace(pre, axis1=-2, axis2=-1)
    tdd = jnp.trace(DD, axis1=-2, axis2=-1)
    dll = jnp.sum(jnp.log(jnp.diagonal(LL, axis1=-2, axis2=-1)), axis=-1)
    return jnp.mean(tp / tdd / dll)


# ----------------------------------- main ------------------------------------
if __name__ == "__main__":
    B = 2
    key = jax.random.PRNGKey(0)
    k1, k2 = jax.random.split(key)

    # Masks (host-side, static): L is lower-triangular, DD is dense.
    maskL = np.tril(np.ones((N, N), dtype=bool))
    maskDD = np.ones((N, N), dtype=bool)
    lL_r, lL_c = np.nonzero(maskL)      # 8256 entries, row-major True order
    dd_r, dd_c = np.nonzero(maskDD)     # 16384 entries

    # DD entries: from a PSD-ish matrix so trace(DD) is well away from zero.
    A = jax.random.normal(k1, (B, N, N), jnp.float32)
    DD_full = jnp.einsum("bij,bkj->bik", A, A) / N + jnp.eye(N, dtype=jnp.float32)[None]
    DD_entries = DD_full[:, dd_r, dd_c]                       # (B, 16384)

    # L entries: small random lower-tri entries with a boosted diagonal.
    L_entries = 0.05 * jax.random.normal(k2, (B, lL_r.size), jnp.float32)
    L_entries = L_entries + jnp.where(lL_r == lL_c, 1.0, 0.0)[None, :]   # (B, 8256)

    maskDD_idx = (jnp.asarray(dd_r), jnp.asarray(dd_c))
    maskL_idx = (jnp.asarray(lL_r), jnp.asarray(lL_c))

    loss_fn = jax.jit(partial(kcondition_loss,
                              maskDD_idx=maskDD_idx, maskL_idx=maskL_idx))
    loss = loss_fn(DD_entries, L_entries)
    jax.block_until_ready(loss)

    ref = _reference_loss(DD_entries, L_entries, maskDD_idx, maskL_idx)
    jax.block_until_ready(ref)

    assert jnp.isfinite(loss)
    assert jnp.abs(loss - ref) <= 1e-2 * jnp.abs(ref) + 1e-5, (loss, ref)
    print("KERNEL_OK")
</pallas_src>

<mosaic_0001>
module attributes {stable_mosaic.version = 11 : i64} {
  func.func @_kcondition_kernel(%arg0: i32, %arg1: memref<1x128x128xf32, #tpu.memory_space<vmem>>, %arg2: memref<1x128x128xf32, #tpu.memory_space<vmem>>, %arg3: memref<1x1x1xf32, #tpu.memory_space<vmem>>) attributes {dimension_semantics = [#tpu.dimension_semantics<parallel>], iteration_bounds = array<i64: 2>, scalar_prefetch = 0 : i64, scratch_operands = 0 : i64, tpu.core_type = #tpu.core_type<tc>, window_params = [{transform_indices = @transform_0, window_bounds = array<i64: 1, 128, 128>}, {transform_indices = @transform_1, window_bounds = array<i64: 1, 128, 128>}, {transform_indices = @transform_2, window_bounds = array<i64: 1, 1, 1>}]} {
    %c0 = arith.constant 0 : index
    %c0_0 = arith.constant 0 : index
    %c0_1 = arith.constant 0 : index
    %0 = vector.load %arg1[%c0, %c0_0, %c0_1] : memref<1x128x128xf32, #tpu.memory_space<vmem>>, vector<1x128x128xf32>
    %1 = vector.shape_cast %0 : vector<1x128x128xf32> to vector<128x128xf32>
    %c0_2 = arith.constant 0 : index
    %c0_3 = arith.constant 0 : index
    %c0_4 = arith.constant 0 : index
    %2 = vector.load %arg2[%c0_2, %c0_3, %c0_4] : memref<1x128x128xf32, #tpu.memory_space<vmem>>, vector<1x128x128xf32>
    %3 = vector.shape_cast %2 : vector<1x128x128xf32> to vector<128x128xf32>
    %4 = tpu.iota {dimensions = array<i32: 0>} : vector<128x128xi32>
    %5 = tpu.iota {dimensions = array<i32: 1>} : vector<128x128xi32>
    %6 = arith.cmpi eq, %4, %5 : vector<128x128xi32>
    %cst = arith.constant 1.000000e-03 : f32
    %7 = vector.broadcast %cst : f32 to vector<128x128xf32>
    %8 = arith.maximumf %3, %7 : vector<128x128xf32>
    %9 = arith.select %6, %8, %3 : vector<128x128xi1>, vector<128x128xf32>
    %cst_5 = arith.constant dense<0.000000e+00> : vector<128x128xf32>
    %10 = tpu.matmul %1, %9, %cst_5 {dimension_numbers = #tpu.dot_dimension_numbers<[1], [0], [0], [1], [0, 0, 1, 1], [], []>} : vector<128x128xf32>, vector<128x128xf32>, vector<128x128xf32> -> vector<128x128xf32>
    %11 = arith.mulf %9, %10 : vector<128x128xf32>
    %cst_6 = arith.constant dense<0.000000e+00> : vector<128xf32>
    %12 = vector.multi_reduction <add>, %11, %cst_6 [1] : vector<128x128xf32> to vector<128xf32>
    %13 = vector.shape_cast %12 : vector<128xf32> to vector<128x1xf32>
    %cst_7 = arith.constant dense<0.000000e+00> : vector<1xf32>
    %14 = vector.multi_reduction <add>, %13, %cst_7 [0] : vector<128x1xf32> to vector<1xf32>
    %15 = vector.shape_cast %14 : vector<1xf32> to vector<1x1xf32>
    %cst_8 = arith.constant 0.000000e+00 : f32
    %16 = vector.broadcast %cst_8 : f32 to vector<128x128xf32>
    %17 = arith.select %6, %1, %16 : vector<128x128xi1>, vector<128x128xf32>
    %cst_9 = arith.constant dense<0.000000e+00> : vector<128xf32>
    %18 = vector.multi_reduction <add>, %17, %cst_9 [1] : vector<128x128xf32> to vector<128xf32>
    %19 = vector.shape_cast %18 : vector<128xf32> to vector<128x1xf32>
    %cst_10 = arith.constant dense<0.000000e+00> : vector<1xf32>
    %20 = vector.multi_reduction <add>, %19, %cst_10 [0] : vector<128x1xf32> to vector<1xf32>
    %21 = vector.shape_cast %20 : vector<1xf32> to vector<1x1xf32>
    %22 = arith.mulf %9, %9 : vector<128x128xf32>
    %cst_11 = arith.constant dense<0.000000e+00> : vector<128xf32>
    %23 = vector.multi_reduction <add>, %22, %cst_11 [0] : vector<128x128xf32> to vector<128xf32>
    %24 = vector.shape_cast %23 : vector<128xf32> to vector<1x128xf32>
    %25 = math.log %24 : vector<1x128xf32>
    %cst_12 = arith.constant dense<0.000000e+00> : vector<1xf32>
    %26 = vector.multi_reduction <add>, %25, %cst_12 [1] : vector<1x128xf32> to vector<1xf32>
    %27 = vector.shape_cast %26 : vector<1xf32> to vector<1x1xf32>
    %28 = arith.divf %15, %21 : vector<1x1xf32>
    %29 = arith.divf %28, %27 : vector<1x1xf32>
    %c0_13 = arith.constant 0 : index
    %c0_14 = arith.constant 0 : index
    %c0_15 = arith.constant 0 : index
    %30 = vector.load %arg3[%c0_13, %c0_14, %c0_15] : memref<1x1x1xf32, #tpu.memory_space<vmem>>, vector<1x1x1xf32>
    %31 = vector.shape_cast %30 : vector<1x1x1xf32> to vector<1x1xf32>
    %32 = vector.shape_cast %29 : vector<1x1xf32> to vector<1x1x1xf32>
    tpu.vector_store %arg3[%c0_13, %c0_14, %c0_15], %32 {strides = array<i32>} : memref<1x1x1xf32, #tpu.memory_space<vmem>>, vector<1x1x1xf32>,
    return
  }
  func.func @transform_0(%arg0: i32) -> (i32, i32, i32) {
    %c0_i32 = arith.constant 0 : i32
    %c0_i32_0 = arith.constant 0 : i32
    %c0_i32_1 = arith.constant 0 : i32
    return %arg0, %c0_i32, %c0_i32_0 : i32, i32, i32
  }
  func.func @transform_1(%arg0: i32) -> (i32, i32, i32) {
    %c0_i32 = arith.constant 0 : i32
    %c0_i32_0 = arith.constant 0 : i32
    %c0_i32_1 = arith.constant 0 : i32
    return %arg0, %c0_i32, %c0_i32_0 : i32, i32, i32
  }
  func.func @transform_2(%arg0: i32) -> (i32, i32, i32) {
    %c0_i32 = arith.constant 0 : i32
    %c0_i32_0 = arith.constant 0 : i32
    %c0_i32_1 = arith.constant 0 : i32
    return %arg0, %c0_i32, %c0_i32_0 : i32, i32, i32
  }
}

</mosaic_0001>

<llo_original>
// kernel: kcondition_loss.1
$region0: #{kcondition_loss.1}
  #allocation0 [shape = 'u32[]', space=smem, size = 0x4, offset = 0x4, fixed_abs, tag = 'smem constant byte address 0x4 - core index']
  #allocation1 [shape = 'u32[144,128]{1,0:T(1,128)}', space=vmem, size = 0x12000, scoped, tag = 'internal scratch']
  %s0 = inlined_call_operand.vmem [shape: f32[2,128,128], index: 0, kind: input, shape index: {}]
  %s1 = inlined_call_operand.vmem [shape: f32[2,128,128], index: 1, kind: input, shape index: {}]
  %s2 = inlined_call_operand.vmem [shape: f32[2,1,1], index: 2, kind: output, shape index: {}]
  %s3 = sld [smem:[#allocation0]]
  $region41: #{kcondition_loss.1} parent=0
    _
  %s5 = ssub.s32 1, %s3
  %s6 = scalar_select 0, %s5, %s3
  loop: start=0, step=1, limit=4
  $region2: #{kcondition_loss.1} parent=0 // loop_pre_header
    _
  $region3: #{kcondition_loss.1} parent=0 // loop_header
    %s8 = sphi 0, %s12
    %p9 = scmp.ge.s32.totalorder %s8, 4
    %s18 = sphi 0, %s20
    %s21 = sphi 0, %s18
    %s22 = sphi 0, %s21
    %s38 = sphi 0, %s22
    %s44 = sphi 0, %s46
    %s47 = sphi 0, %s44
    %s48 = sphi 0, %s47
    %s64 = sphi 0, %s48
    %s70 = sphi 0, %s72
    %s73 = sphi 0, %s70
    %s74 = sphi 0, %s73
    %s90 = sphi 0, %s74
  $region4: #{kcondition_loss.1} parent=0 // loop_header_branch
    %11 = sbr.rel (%p9) target = $region8
  $region5: #{kcondition_loss.1} parent=0 // loop_body
    %s13 = ssub.s32 %s8, 1
    %s14 = ssub.s32 %s8, 2
    %s15 = sadd.s32 %s8, 1
    %s16 = ssub.s32 %s8, %s15
    %p17 = scmp.eq.s32.totalorder %s16, 0
    %s19 = sadd.s32 %s18, 1
    %s20 = scalar_select %p17, %s18, %s19
    %p23 = pneg %p17
    %p24 = scmp.eq.s32.totalorder %s8, 1
    %p25 = por %p23, %p24
    %p26 = scmp.ne.s32.totalorder %s18, %s21
    %p27 = scmp.eq.s32.totalorder %s8, 0
    %p28 = por %p26, %p27
    %p29 = scmp.ne.s32.totalorder %s18, %s21
    %p30 = scmp.eq.s32.totalorder %s13, 1
    %p31 = por %p29, %p30
    %p32 = scmp.ne.s32.totalorder %s21, %s22
    %p33 = scmp.eq.s32.totalorder %s13, 0
    %p34 = por %p32, %p33
    %p35 = scmp.ne.s32.totalorder %s21, %s22
    %p36 = scmp.eq.s32.totalorder %s14, 1
    %p37 = por %p35, %p36
    %p39 = scmp.ne.s32.totalorder %s22, %s38
    %p40 = scmp.eq.s32.totalorder %s14, 0
    %p41 = por %p39, %p40
    %s42 = ssub.s32 %s8, %s15
    %p43 = scmp.eq.s32.totalorder %s42, 0
    %s45 = sadd.s32 %s44, 1
    %s46 = scalar_select %p43, %s44, %s45
    %p49 = pneg %p43
    %p50 = scmp.eq.s32.totalorder %s8, 1
    %p51 = por %p49, %p50
    %p52 = scmp.ne.s32.totalorder %s44, %s47
    %p53 = scmp.eq.s32.totalorder %s8, 0
    %p54 = por %p52, %p53
    %p55 = scmp.ne.s32.totalorder %s44, %s47
    %p56 = scmp.eq.s32.totalorder %s13, 1
    %p57 = por %p55, %p56
    %p58 = scmp.ne.s32.totalorder %s47, %s48
    %p59 = scmp.eq.s32.totalorder %s13, 0
    %p60 = por %p58, %p59
    %p61 = scmp.ne.s32.totalorder %s47, %s48
    %p62 = scmp.eq.s32.totalorder %s14, 1
    %p63 = por %p61, %p62
    %p65 = scmp.ne.s32.totalorder %s48, %s64
    %p66 = scmp.eq.s32.totalorder %s14, 0
    %p67 = por %p65, %p66
    %s68 = ssub.s32 %s8, %s15
    %p69 = scmp.eq.s32.totalorder %s68, 0
    %s71 = sadd.s32 %s70, 1
    %s72 = scalar_select %p69, %s70, %s71
    %p75 = pneg %p69
    %p76 = scmp.eq.s32.totalorder %s8, 1
    %p77 = por %p75, %p76
    %p78 = scmp.ne.s32.totalorder %s70, %s73
    %p79 = scmp.eq.s32.totalorder %s8, 0
    %p80 = por %p78, %p79
    %p81 = scmp.ne.s32.totalorder %s70, %s73
    %p82 = scmp.eq.s32.totalorder %s13, 1
    %p83 = por %p81, %p82
    %p84 = scmp.ne.s32.totalorder %s73, %s74
    %p85 = scmp.eq.s32.totalorder %s13, 0
    %p86 = por %p84, %p85
    %p87 = scmp.ne.s32.totalorder %s73, %s74
    %p88 = scmp.eq.s32.totalorder %s14, 1
    %p89 = por %p87, %p88
    %p91 = scmp.ne.s32.totalorder %s74, %s90
    %p92 = scmp.eq.s32.totalorder %s14, 0
    %p93 = por %p91, %p92
    %p94 = scmp.le.s32.totalorder 1, %s8
    %p95 = scmp.lt.s32.totalorder %s8, 3
    %p96 = pnand %p94, %p95
    %p97 = pneg %p96
    // Predicated region
    $region9: #{kcondition_loss.1} parent=5 // pred_check
      _
    $region10: #{kcondition_loss.1} parent=5 // pred_check_branch
      %99 = sbr.rel (%p96) target = $region12
    $region11: #{kcondition_loss.1} parent=5 // pred_region
      %s100 = ssub.s32 %s8, 1
    $region12: #{kcondition_loss.1} parent=5 // pred_fallthru
      _
    %p101 = scmp.lt.s32.totalorder %s8, 2
    // Predicated region
    $region13: #{kcondition_loss.1} parent=5 // pred_check
      %p102 = pneg %p101
    $region14: #{kcondition_loss.1} parent=5 // pred_check_branch
      %104 = sbr.rel (%p102) target = $region16
    $region15: #{kcondition_loss.1} parent=5 // pred_region
      // Predicated region
      $region17: #{kcondition_loss.1} parent=15 // pred_check
        %p105 = pneg %p28
      $region18: #{kcondition_loss.1} parent=15 // pred_check_branch
        %107 = sbr.rel (%p105) target = $region20
      $region19: #{kcondition_loss.1} parent=15 // pred_region
        %p108 = scmp.lt.s32.totalorder %s8, 1
        %s109 = scalar_select %p108, %s8, 1
        %s110 = smul.addr %s109, 16
        %s111 = smul.addr %s110, 8
        %s112 = scalar_lea.vmem %s0, %s111
      $region20: #{kcondition_loss.1} parent=15 // pred_fallthru
        _
      // Predicated region
      $region21: #{kcondition_loss.1} parent=15 // pred_check
        %p113 = pneg %p54
      $region22: #{kcondition_loss.1} parent=15 // pred_check_branch
        %115 = sbr.rel (%p113) target = $region24
      $region23: #{kcondition_loss.1} parent=15 // pred_region
        %p116 = scmp.lt.s32.totalorder %s8, 1
        %s117 = scalar_select %p116, %s8, 1
        %s118 = smul.addr %s117, 16
        %s119 = smul.addr %s118, 8
        %s120 = scalar_lea.vmem %s1, %s119
      $region24: #{kcondition_loss.1} parent=15 // pred_fallthru
        _
    $region16: #{kcondition_loss.1} parent=5 // pred_fallthru
      _
    %p121 = scmp.le.s32.totalorder 1, %s8
    %p122 = scmp.lt.s32.totalorder %s8, 3
    %p123 = pnand %p121, %p122
    %p124 = pneg %p123
    // Predicated region
    $region25: #{kcondition_loss.1} parent=5 // pred_check
      _
    $region26: #{kcondition_loss.1} parent=5 // pred_check_branch
      %126 = sbr.rel (%p123) target = $region28
    $region27: #{kcondition_loss.1} parent=5 // pred_region
      %s127 = ssub.s32 %s8, 1
      %p128 = scmp.lt.s32.totalorder %s13, 1
      %s129 = scalar_select %p128, %s13, 1
      %s130 = smul.addr %s129, 16
      %s131 = smul.addr %s130, 8
      %s132 = scalar_lea.vmem %s0, %s131
      %p133 = pneg %p34
      %p134 = pneg %p31
      %p135 = scmp.lt.s32.totalorder %s13, 1
      %s136 = scalar_select %p135, %s13, 1
      %s137 = smul.addr %s136, 16
      %s138 = smul.addr %s137, 8
      %s139 = scalar_lea.vmem %s1, %s138
      %p140 = pneg %p60
      %p141 = pneg %p57
      %p142 = pneg %p86
      %p143 = pneg %p83
      %p144 = scmp.lt.s32.totalorder %s13, 1
      %s145 = scalar_select %p144, %s13, 1
      %s146 = scalar_lea.vmem %s2, %s145
      %p147 = scmp.lt.s32.totalorder %s13, 1
      %s148 = scalar_select %p147, %s13, 1
      %s149 = smul.addr %s148, 16
      %s150 = smul.addr %s149, 8
      %s151 = scalar_lea.vmem %s0, %s150
      %p152 = scmp.lt.s32.totalorder %s13, 1
      %s153 = scalar_select %p152, %s13, 1
      %s154 = smul.addr %s153, 16
      %s155 = smul.addr %s154, 8
      %s156 = scalar_lea.vmem %s1, %s155
      %p157 = scmp.lt.s32.totalorder %s13, 1
      %s158 = scalar_select %p157, %s13, 1
      %s159 = scalar_lea.vmem %s2, %s158
      %v160 = vld [vmem:[%s151] sm:$0xff]
      %v161 = vld [vmem:[%s151 + $0x8] sm:$0xff]
      %v162 = vld [vmem:[%s151 + $0x10] sm:$0xff]
      %v163 = vld [vmem:[%s151 + $0x18] sm:$0xff]
      %v164 = vld [vmem:[%s151 + $0x20] sm:$0xff]
      %v165 = vld [vmem:[%s151 + $0x28] sm:$0xff]
      %v166 = vld [vmem:[%s151 + $0x30] sm:$0xff]
      %v167 = vld [vmem:[%s151 + $0x38] sm:$0xff]
      %v168 = vld [vmem:[%s151 + $0x40] sm:$0xff]
      %v169 = vld [vmem:[%s151 + $0x48] sm:$0xff]
      %v170 = vld [vmem:[%s151 + $0x50] sm:$0xff]
      %v171 = vld [vmem:[%s151 + $0x58] sm:$0xff]
      %v172 = vld [vmem:[%s151 + $0x60] sm:$0xff]
      %v173 = vld [vmem:[%s151 + $0x68] sm:$0xff]
      %v174 = vld [vmem:[%s151 + $0x70] sm:$0xff]
      %v175 = vld [vmem:[%s151 + $0x78] sm:$0xff]
      %v176 = vld [vmem:[%s156] sm:$0xff]
      %v177 = vld [vmem:[%s156 + $0x8] sm:$0xff]
      %v178 = vld [vmem:[%s156 + $0x10] sm:$0xff]
      %v179 = vld [vmem:[%s156 + $0x18] sm:$0xff]
      %v180 = vld [vmem:[%s156 + $0x20] sm:$0xff]
      %v181 = vld [vmem:[%s156 + $0x28] sm:$0xff]
      %v182 = vld [vmem:[%s156 + $0x30] sm:$0xff]
      %v183 = vld [vmem:[%s156 + $0x38] sm:$0xff]
      %v184 = vld [vmem:[%s156 + $0x40] sm:$0xff]
      %v185 = vld [vmem:[%s156 + $0x48] sm:$0xff]
      %v186 = vld [vmem:[%s156 + $0x50] sm:$0xff]
      %v187 = vld [vmem:[%s156 + $0x58] sm:$0xff]
      %v188 = vld [vmem:[%s156 + $0x60] sm:$0xff]
      %v189 = vld [vmem:[%s156 + $0x68] sm:$0xff]
      %v190 = vld [vmem:[%s156 + $0x70] sm:$0xff]
      %v191 = vld [vmem:[%s156 + $0x78] sm:$0xff]
      %v192 = vlaneseq
      %v193 = vshrl.u32 %v192, 7
      %v194 = vadd.s32 %v193, 8
      %v195 = vadd.s32 %v193, 16
      %v196 = vadd.s32 %v193, 24
      %v197 = vadd.s32 %v193, 32
      %v198 = vadd.s32 %v193, 40
      %v199 = vadd.s32 %v193, 48
      %v200 = vadd.s32 %v193, 56
      %v201 = vadd.s32 %v193, 64
      %v202 = vadd.s32 %v193, 72
      %v203 = vadd.s32 %v193, 80
      %v204 = vadd.s32 %v193, 88
      %v205 = vadd.s32 %v193, 96
      %v206 = vadd.s32 %v193, 104
      %v207 = vadd.s32 %v193, 112
      %v208 = vadd.s32 %v193, 120
      %v209 = vlaneseq
      %v210 = vand.u32 %v209, 127
      %vm211 = vcmp.eq.s32.totalorder %v193, %v210
      %vm212 = vcmp.eq.s32.totalorder %v194, %v210
      %vm213 = vcmp.eq.s32.totalorder %v195, %v210
      %vm214 = vcmp.eq.s32.totalorder %v196, %v210
      %vm215 = vcmp.eq.s32.totalorder %v197, %v210
      %vm216 = vcmp.eq.s32.totalorder %v198, %v210
      %vm217 = vcmp.eq.s32.totalorder %v199, %v210
      %vm218 = vcmp.eq.s32.totalorder %v200, %v210
      %vm219 = vcmp.eq.s32.totalorder %v201, %v210
      %vm220 = vcmp.eq.s32.totalorder %v202, %v210
      %vm221 = vcmp.eq.s32.totalorder %v203, %v210
      %vm222 = vcmp.eq.s32.totalorder %v204, %v210
      %vm223 = vcmp.eq.s32.totalorder %v205, %v210
      %vm224 = vcmp.eq.s32.totalorder %v206, %v210
      %vm225 = vcmp.eq.s32.totalorder %v207, %v210
      %vm226 = vcmp.eq.s32.totalorder %v208, %v210
      %v227 = vmax.f32 %v176, 0.001
      %v228 = vmax.f32 %v177, 0.001
      %v229 = vmax.f32 %v178, 0.001
      %v230 = vmax.f32 %v179, 0.001
      %v231 = vmax.f32 %v180, 0.001
      %v232 = vmax.f32 %v181, 0.001
      %v233 = vmax.f32 %v182, 0.001
      %v234 = vmax.f32 %v183, 0.001
      %v235 = vmax.f32 %v184, 0.001
      %v236 = vmax.f32 %v185, 0.001
      %v237 = vmax.f32 %v186, 0.001
      %v238 = vmax.f32 %v187, 0.001
      %v239 = vmax.f32 %v188, 0.001
      %v240 = vmax.f32 %v189, 0.001
      %v241 = vmax.f32 %v190, 0.001
      %v242 = vmax.f32 %v191, 0.001
      %v243 = vsel %vm211, %v227, %v176
      %v244 = vsel %vm212, %v228, %v177
      %v245 = vsel %vm213, %v229, %v178
      %v246 = vsel %vm214, %v230, %v179
      %v247 = vsel %vm215, %v231, %v180
      %v248 = vsel %vm216, %v232, %v181
      %v249 = vsel %vm217, %v233, %v182
      %v250 = vsel %vm218, %v234, %v183
      %v251 = vsel %vm219, %v235, %v184
      %v252 = vsel %vm220, %v236, %v185
      %v253 = vsel %vm221, %v237, %v186
      %v254 = vsel %vm222, %v238, %v187
      %v255 = vsel %vm223, %v239, %v188
      %v256 = vsel %vm224, %v240, %v189
      %v257 = vsel %vm225, %v241, %v190
      %v258 = vsel %vm226, %v242, %v191
      %259 = vmatprep.subr.mxu0 0.0
      %260 = vmatpush1.msra.mxu0 %v258
      %261 = vmatprep.subr.mxu0 0.0
      %262 = vmatpush1.msra.mxu0 %v257
      %263 = vmatprep.subr.mxu0 0.0
      %264 = vmatpush1.msra.mxu0 %v256
      %265 = vmatprep.subr.mxu0 0.0
      %266 = vmatpush1.msra.mxu0 %v255
      %267 = vmatprep.subr.mxu0 0.0
      %268 = vmatpush1.msra.mxu0 %v254
      %269 = vmatprep.subr.mxu0 0.0
      %270 = vmatpush1.msra.mxu0 %v253
      %271 = vmatprep.subr.mxu0 0.0
      %272 = vmatpush1.msra.mxu0 %v252
      %273 = vmatprep.subr.mxu0 0.0
      %274 = vmatpush1.msra.mxu0 %v251
      %275 = vmatprep.subr.mxu0 0.0
      %276 = vmatpush1.msra.mxu0 %v250
      %277 = vmatprep.subr.mxu0 0.0
      %278 = vmatpush1.msra.mxu0 %v249
      %279 = vmatprep.subr.mxu0 0.0
      %280 = vmatpush1.msra.mxu0 %v248
      %281 = vmatprep.subr.mxu0 0.0
      %282 = vmatpush1.msra.mxu0 %v247
      %283 = vmatprep.subr.mxu0 0.0
      %284 = vmatpush1.msra.mxu0 %v246
      %285 = vmatprep.subr.mxu0 0.0
      %286 = vmatpush1.msra.mxu0 %v245
      %287 = vmatprep.subr.mxu0 0.0
      %288 = vmatpush1.msra.mxu0 %v244
      %289 = vmatprep.subr.mxu0 0.0
      %290 = vmatpush1.msra.mxu0 %v243
      %291 = vmatprep.subr.mxu0 0.0
      %292 = vmatpush2.msra.mxu0 0.0
      %293 = vmatprep.subr.mxu0 0.0
      %294 = vmatpush2.msra.mxu0 0.0
      %295 = vmatprep.subr.mxu0 0.0
      %296 = vmatpush2.msra.mxu0 0.0
      %297 = vmatprep.subr.mxu0 0.0
      %298 = vmatpush2.msra.mxu0 0.0
      %299 = vmatprep.subr.mxu0 0.0
      %300 = vmatpush2.msra.mxu0 0.0
      %301 = vmatprep.subr.mxu0 0.0
      %302 = vmatpush2.msra.mxu0 0.0
      %303 = vmatprep.subr.mxu0 0.0
      %304 = vmatpush2.msra.mxu0 0.0
      %305 = vmatprep.subr.mxu0 0.0
      %306 = vmatpush2.msra.mxu0 0.0
      %307 = vmatprep.subr.mxu0 0.0
      %308 = vmatpush2.msra.mxu0 0.0
      %309 = vmatprep.subr.mxu0 0.0
      %310 = vmatpush2.msra.mxu0 0.0
      %311 = vmatprep.subr.mxu0 0.0
      %312 = vmatpush2.msra.mxu0 0.0
      %313 = vmatprep.subr.mxu0 0.0
      %314 = vmatpush2.msra.mxu0 0.0
      %315 = vmatprep.subr.mxu0 0.0
      %316 = vmatpush2.msra.mxu0 0.0
      %317 = vmatprep.subr.mxu0 0.0
      %318 = vmatpush2.msra.mxu0 0.0
      %319 = vmatprep.subr.mxu0 0.0
      %320 = vmatpush2.msra.mxu0 0.0
      %321 = vmatprep.subr.mxu0 0.0
      %322 = vmatpush2.msra.mxu0 0.0
      %323 = vmatprep.mubr.f32.mxu0 0.0
      %324 = vmatmul.mubr.f32.gmra.mxu0 %v160
      %v325 = vpop.f32.mrf.mxu0
      %v326 = vadd.f32 0.0, %v325
      %v327 = vpop.f32.mrf.mxu0
      %328 = vmatprep.mubr.f32.mxu0 0.0
      %329 = vmatmul.mubr.f32.gmra.mxu0 %v161
      %v330 = vpop.f32.mrf.mxu0
      %v331 = vadd.f32 0.0, %v330
      %v332 = vpop.f32.mrf.mxu0
      %333 = vmatprep.mubr.f32.mxu0 0.0
      %334 = vmatmul.mubr.f32.gmra.mxu0 %v162
      %v335 = vpop.f32.mrf.mxu0
      %v336 = vadd.f32 0.0, %v335
      %v337 = vpop.f32.mrf.mxu0
      %338 = vmatprep.mubr.f32.mxu0 0.0
      %339 = vmatmul.mubr.f32.gmra.mxu0 %v163
      %v340 = vpop.f32.mrf.mxu0
      %v341 = vadd.f32 0.0, %v340
      %v342 = vpop.f32.mrf.mxu0
      %343 = vmatprep.mubr.f32.mxu0 0.0
      %344 = vmatmul.mubr.f32.gmra.mxu0 %v164
      %v345 = vpop.f32.mrf.mxu0
      %v346 = vadd.f32 0.0, %v345
      %v347 = vpop.f32.mrf.mxu0
      %348 = vmatprep.mubr.f32.mxu0 0.0
      %349 = vmatmul.mubr.f32.gmra.mxu0 %v165
      %v350 = vpop.f32.mrf.mxu0
      %v351 = vadd.f32 0.0, %v350
      %v352 = vpop.f32.mrf.mxu0
      %353 = vmatprep.mubr.f32.mxu0 0.0
      %354 = vmatmul.mubr.f32.gmra.mxu0 %v166
      %v355 = vpop.f32.mrf.mxu0
      %v356 = vadd.f32 0.0, %v355
      %v357 = vpop.f32.mrf.mxu0
      %358 = vmatprep.mubr.f32.mxu0 0.0
      %359 = vmatmul.mubr.f32.gmra.mxu0 %v167
      %v360 = vpop.f32.mrf.mxu0
      %v361 = vadd.f32 0.0, %v360
      %v362 = vpop.f32.mrf.mxu0
      %363 = vmatprep.mubr.f32.mxu0 0.0
      %364 = vmatmul.mubr.f32.gmra.mxu0 %v168
      %v365 = vpop.f32.mrf.mxu0
      %v366 = vadd.f32 0.0, %v365
      %v367 = vpop.f32.mrf.mxu0
      %368 = vmatprep.mubr.f32.mxu0 0.0
      %369 = vmatmul.mubr.f32.gmra.mxu0 %v169
      %v370 = vpop.f32.mrf.mxu0
      %v371 = vadd.f32 0.0, %v370
      %v372 = vpop.f32.mrf.mxu0
      %373 = vmatprep.mubr.f32.mxu0 0.0
      %374 = vmatmul.mubr.f32.gmra.mxu0 %v170
      %v375 = vpop.f32.mrf.mxu0
      %v376 = vadd.f32 0.0, %v375
      %v377 = vpop.f32.mrf.mxu0
      %378 = vmatprep.mubr.f32.mxu0 0.0
      %379 = vmatmul.mubr.f32.gmra.mxu0 %v171
      %v380 = vpop.f32.mrf.mxu0
      %v381 = vadd.f32 0.0, %v380
      %v382 = vpop.f32.mrf.mxu0
      %383 = vmatprep.mubr.f32.mxu0 0.0
      %384 = vmatmul.mubr.f32.gmra.mxu0 %v172
      %v385 = vpop.f32.mrf.mxu0
      %v386 = vadd.f32 0.0, %v385
      %v387 = vpop.f32.mrf.mxu0
      %388 = vmatprep.mubr.f32.mxu0 0.0
      %389 = vmatmul.mubr.f32.gmra.mxu0 %v173
      %v390 = vpop.f32.mrf.mxu0
      %v391 = vadd.f32 0.0, %v390
      %v392 = vpop.f32.mrf.mxu0
      %393 = vmatprep.mubr.f32.mxu0 0.0
      %394 = vmatmul.mubr.f32.gmra.mxu0 %v174
      %v395 = vpop.f32.mrf.mxu0
      %v396 = vadd.f32 0.0, %v395
      %v397 = vpop.f32.mrf.mxu0
      %398 = vmatprep.mubr.f32.mxu0 0.0
      %399 = vmatmul.mubr.f32.gmra.mxu0 %v175
      %v400 = vpop.f32.mrf.mxu0
      %v401 = vadd.f32 0.0, %v400
      %v402 = vpop.f32.mrf.mxu0
      %403 = vdwg.mxu0
      %v404 = vmul.f32 %v243, %v326
      %v405 = vmul.f32 %v244, %v331
      %v406 = vmul.f32 %v245, %v336
      %v407 = vmul.f32 %v246, %v341
      %v408 = vmul.f32 %v247, %v346
      %v409 = vmul.f32 %v248, %v351
      %v410 = vmul.f32 %v249, %v356
      %v411 = vmul.f32 %v250, %v361
      %v412 = vmul.f32 %v251, %v366
      %v413 = vmul.f32 %v252, %v371
      %v414 = vmul.f32 %v253, %v376
      %v415 = vmul.f32 %v254, %v381
      %v416 = vmul.f32 %v255, %v386
      %v417 = vmul.f32 %v256, %v391
      %v418 = vmul.f32 %v257, %v396
      %v419 = vmul.f32 %v258, %v401
      %420 = vadd.xlane.f32.xlu0 %v404
      %v421 = vpop.xlane.xlu0 %420
      %422 = vadd.xlane.f32.xlu0 %v405
      %v423 = vpop.xlane.xlu0 %422
      %424 = vadd.xlane.f32.xlu0 %v406
      %v425 = vpop.xlane.xlu0 %424
      %426 = vadd.xlane.f32.xlu0 %v407
      %v427 = vpop.xlane.xlu0 %426
      %428 = vadd.xlane.f32.xlu0 %v408
      %v429 = vpop.xlane.xlu0 %428
      %430 = vadd.xlane.f32.xlu0 %v409
      %v431 = vpop.xlane.xlu0 %430
      %432 = vadd.xlane.f32.xlu0 %v410
      %v433 = vpop.xlane.xlu0 %432
      %434 = vadd.xlane.f32.xlu0 %v411
      %v435 = vpop.xlane.xlu0 %434
      %436 = vadd.xlane.f32.xlu0 %v412
      %v437 = vpop.xlane.xlu0 %436
      %438 = vadd.xlane.f32.xlu0 %v413
      %v439 = vpop.xlane.xlu0 %438
      %440 = vadd.xlane.f32.xlu0 %v414
      %v441 = vpop.xlane.xlu0 %440
      %442 = vadd.xlane.f32.xlu0 %v415
      %v443 = vpop.xlane.xlu0 %442
      %444 = vadd.xlane.f32.xlu0 %v416
      %v445 = vpop.xlane.xlu0 %444
      %446 = vadd.xlane.f32.xlu0 %v417
      %v447 = vpop.xlane.xlu0 %446
      %448 = vadd.xlane.f32.xlu0 %v418
      %v449 = vpop.xlane.xlu0 %448
      %450 = vadd.xlane.f32.xlu0 %v419
      %v451 = vpop.xlane.xlu0 %450
      %v452 = vadd.f32 %v421, %v423
      %v453 = vadd.f32 %v452, %v425
      %v454 = vadd.f32 %v453, %v427
      %v455 = vadd.f32 %v454, %v429
      %v456 = vadd.f32 %v455, %v431
      %v457 = vadd.f32 %v456, %v433
      %v458 = vadd.f32 %v457, %v435
      %v459 = vadd.f32 %v458, %v437
      %v460 = vadd.f32 %v459, %v439
      %v461 = vadd.f32 %v460, %v441
      %v462 = vadd.f32 %v461, %v443
      %v463 = vadd.f32 %v462, %v445
      %v464 = vadd.f32 %v463, %v447
      %v465 = vadd.f32 %v464, %v449
      %v466 = vadd.f32 %v465, %v451
      %v467 = vrot.slane %v466, 4
      %v468 = vadd.f32 %v466, %v467
      %v469 = vrot.slane %v468, 2
      %v470 = vadd.f32 %v468, %v469
      %v471 = vrot.slane %v470, 1
      %v472 = vadd.f32 %v470, %v471
      %v473 = vsel %vm211, %v160, 0.0
      %v474 = vsel %vm212, %v161, 0.0
      %v475 = vsel %vm213, %v162, 0.0
      %v476 = vsel %vm214, %v163, 0.0
      %v477 = vsel %vm215, %v164, 0.0
      %v478 = vsel %vm216, %v165, 0.0
      %v479 = vsel %vm217, %v166, 0.0
      %v480 = vsel %vm218, %v167, 0.0
      %v481 = vsel %vm219, %v168, 0.0
      %v482 = vsel %vm220, %v169, 0.0
      %v483 = vsel %vm221, %v170, 0.0
      %v484 = vsel %vm222, %v171, 0.0
      %v485 = vsel %vm223, %v172, 0.0
      %v486 = vsel %vm224, %v173, 0.0
      %v487 = vsel %vm225, %v174, 0.0
      %v488 = vsel %vm226, %v175, 0.0
      %489 = vadd.xlane.f32.xlu0 %v473
      %v490 = vpop.xlane.xlu0 %489
      %491 = vadd.xlane.f32.xlu0 %v474
      %v492 = vpop.xlane.xlu0 %491
      %493 = vadd.xlane.f32.xlu0 %v475
      %v494 = vpop.xlane.xlu0 %493
      %495 = vadd.xlane.f32.xlu0 %v476
      %v496 = vpop.xlane.xlu0 %495
      %497 = vadd.xlane.f32.xlu0 %v477
      %v498 = vpop.xlane.xlu0 %497
      %499 = vadd.xlane.f32.xlu0 %v478
      %v500 = vpop.xlane.xlu0 %499
      %501 = vadd.xlane.f32.xlu0 %v479
      %v502 = vpop.xlane.xlu0 %501
      %503 = vadd.xlane.f32.xlu0 %v480
      %v504 = vpop.xlane.xlu0 %503
      %505 = vadd.xlane.f32.xlu0 %v481
      %v506 = vpop.xlane.xlu0 %505
      %507 = vadd.xlane.f32.xlu0 %v482
      %v508 = vpop.xlane.xlu0 %507
      %509 = vadd.xlane.f32.xlu0 %v483
      %v510 = vpop.xlane.xlu0 %509
      %511 = vadd.xlane.f32.xlu0 %v484
      %v512 = vpop.xlane.xlu0 %511
      %513 = vadd.xlane.f32.xlu0 %v485
      %v514 = vpop.xlane.xlu0 %513
      %515 = vadd.xlane.f32.xlu0 %v486
      %v516 = vpop.xlane.xlu0 %515
      %517 = vadd.xlane.f32.xlu0 %v487
      %v518 = vpop.xlane.xlu0 %517
      %519 = vadd.xlane.f32.xlu0 %v488
      %v520 = vpop.xlane.xlu0 %519
      %v521 = vadd.f32 %v490, %v492
      %v522 = vadd.f32 %v521, %v494
      %v523 = vadd.f32 %v522, %v496
      %v524 = vadd.f32 %v523, %v498
      %v525 = vadd.f32 %v524, %v500
      %v526 = vadd.f32 %v525, %v502
      %v527 = vadd.f32 %v526, %v504
      %v528 = vadd.f32 %v527, %v506
      %v529 = vadd.f32 %v528, %v508
      %v530 = vadd.f32 %v529, %v510
      %v531 = vadd.f32 %v530, %v512
      %v532 = vadd.f32 %v531, %v514
      %v533 = vadd.f32 %v532, %v516
      %v534 = vadd.f32 %v533, %v518
      %v535 = vadd.f32 %v534, %v520
      %v536 = vrot.slane %v535, 4
      %v537 = vadd.f32 %v535, %v536
      %v538 = vrot.slane %v537, 2
      %v539 = vadd.f32 %v537, %v538
      %v540 = vrot.slane %v539, 1
      %v541 = vadd.f32 %v539, %v540
      %v542 = vmul.f32 %v243, %v243
      %v543 = vmul.f32 %v244, %v244
      %v544 = vmul.f32 %v245, %v245
      %v545 = vmul.f32 %v246, %v246
      %v546 = vmul.f32 %v247, %v247
      %v547 = vmul.f32 %v248, %v248
      %v548 = vmul.f32 %v249, %v249
      %v549 = vmul.f32 %v250, %v250
      %v550 = vmul.f32 %v251, %v251
      %v551 = vmul.f32 %v252, %v252
      %v552 = vmul.f32 %v253, %v253
      %v553 = vmul.f32 %v254, %v254
      %v554 = vmul.f32 %v255, %v255
      %v555 = vmul.f32 %v256, %v256
      %v556 = vmul.f32 %v257, %v257
      %v557 = vmul.f32 %v258, %v258
      %v558 = vadd.f32 %v542, %v543
      %v559 = vadd.f32 %v558, %v544
      %v560 = vadd.f32 %v559, %v545
      %v561 = vadd.f32 %v560, %v546
      %v562 = vadd.f32 %v561, %v547
      %v563 = vadd.f32 %v562, %v548
      %v564 = vadd.f32 %v563, %v549
      %v565 = vadd.f32 %v564, %v550
      %v566 = vadd.f32 %v565, %v551
      %v567 = vadd.f32 %v566, %v552
      %v568 = vadd.f32 %v567, %v553
      %v569 = vadd.f32 %v568, %v554
      %v570 = vadd.f32 %v569, %v555
      %v571 = vadd.f32 %v570, %v556
      %v572 = vadd.f32 %v571, %v557
      %v573 = vrot.slane %v572, 4
      %v574 = vadd.f32 %v572, %v573
      %v575 = vrot.slane %v574, 2
      %v576 = vadd.f32 %v574, %v575
      %v577 = vrot.slane %v576, 1
      %v578 = vadd.f32 %v576, %v577
      %v579 = vlog2.pop %v578
      %v580 = vmul.f32 %v579, 0.6931472
      %581 = vadd.xlane.f32.xlu0 %v580
      %v582 = vpop.xlane.xlu0 %581
      %v583 = vrcp.pop %v541
      %v584 = vmul.f32 %v472, %v583
      %v585 = vrcp.pop %v582
      %v586 = vmul.f32 %v584, %v585
      %vm587 = vcmask 0
      %588 = vst.msk [vmem:[%s159] sm:$0x1] %vm587, %v586
      %p589 = scmp.lt.s32.totalorder %s13, 1
      %s590 = scalar_select %p589, %s13, 1
      %s591 = scalar_lea.vmem %s2, %s590
      // Predicated region
      $region29: #{kcondition_loss.1} parent=27 // pred_check
        %p592 = pneg %p83
      $region30: #{kcondition_loss.1} parent=27 // pred_check_branch
        %594 = sbr.rel (%p592) target = $region32
      $region31: #{kcondition_loss.1} parent=27 // pred_region
        _
      $region32: #{kcondition_loss.1} parent=27 // pred_fallthru
        _
    $region28: #{kcondition_loss.1} parent=5 // pred_fallthru
      _
    %p595 = scmp.le.s32.totalorder 2, %s8
    // Predicated region
    $region33: #{kcondition_loss.1} parent=5 // pred_check
      %p596 = pneg %p595
    $region34: #{kcondition_loss.1} parent=5 // pred_check_branch
      %598 = sbr.rel (%p596) target = $region36
    $region35: #{kcondition_loss.1} parent=5 // pred_region
      %s599 = ssub.s32 %s8, 2
      // Predicated region
      $region37: #{kcondition_loss.1} parent=35 // pred_check
        %p600 = pneg %p89
      $region38: #{kcondition_loss.1} parent=35 // pred_check_branch
        %602 = sbr.rel (%p600) target = $region40
      $region39: #{kcondition_loss.1} parent=35 // pred_region
        %p603 = scmp.lt.s32.totalorder %s14, 1
        %s604 = scalar_select %p603, %s14, 1
        %s605 = scalar_lea.vmem %s2, %s604
      $region40: #{kcondition_loss.1} parent=35 // pred_fallthru
        _
    $region36: #{kcondition_loss.1} parent=5 // pred_fallthru
      _
  $region6: #{kcondition_loss.1} parent=0 // loop_footer
    %s12 = sadd.s32 1, %s8
  $region7: #{kcondition_loss.1} parent=0 // loop_footer_branch
    %7 = sbr.rel target = $region3
  $region8: #{kcondition_loss.1} parent=0 // loop_exit
    _

</llo_original>
